<compile_context>
chip_gen: v5e
topology: v5e:2x2
jax: 0.10.0
libtpu: 0.0.40
codegen_flags: <defaults>
</compile_context>

<pallas_src>
import jax
import jax.numpy as jnp
from jax.experimental import pallas as pl
from jax.experimental.pallas import tpu as pltpu


def _attention_kernel(enc_ref, dec_ref, w_enc_ref, w_dec_ref, misc_ref,
                      out_w_ref, out_a_ref):
    bm, L, D = enc_ref.shape
    A = w_enc_ref.shape[1]

    enc = enc_ref[...]                                          # (bm, L, D)

    # Encoder projection on the MXU: one big (bm*L, D) @ (D, A) matmul.
    # L is a multiple of 8 here, so the reshape is a sublane-merge view.
    enc_attn = jnp.dot(enc.reshape(bm * L, D), w_enc_ref[...],
                       preferred_element_type=jnp.float32).reshape(bm, L, A)

    # Decoder projection + folded (b_enc + b_dec) bias row (misc row 1).
    dec_attn = jnp.dot(dec_ref[...], w_dec_ref[...],
                       preferred_element_type=jnp.float32) + misc_ref[1:2, :]

    # ReLU(enc_attn + dec_attn broadcast over L)
    hidden = jnp.maximum(enc_attn + dec_attn[:, None, :], 0.0)  # (bm, L, A)

    # fc_attn as VPU multiply + lane reduce -> lane-dense (bm, L) scores.
    # (b_fc omitted: softmax shift-invariance makes it a no-op for outputs.)
    scores = jnp.sum(hidden * misc_ref[0:1, :], axis=-1)        # (bm, L)

    # Softmax over L (lane dimension).
    m = jnp.max(scores, axis=-1, keepdims=True)
    e = jnp.exp(scores - m)
    denom = jnp.sum(e, axis=-1, keepdims=True)
    alpha = e * pl.reciprocal(denom, approx=False)              # (bm, L)

    # Attention-weighted encoding: VPU multiply + sublane reduce over L.
    # (Replaces the q=1 batched einsum -> no bm tiny M=1 MXU matmuls.)
    weighted = jnp.sum(alpha[:, :, None] * enc, axis=1)         # (bm, D)

    out_w_ref[...] = weighted.astype(out_w_ref.dtype)
    out_a_ref[...] = alpha.astype(out_a_ref.dtype)


def attention_mechanism(encoder_out, decoder_out, params, *, block_m=256):
    """encoder_out: [M, L, D] f32, decoder_out: [M, h] f32.
    Returns (attn_weighted_encoding [M, D], alpha [M, L])."""
    M, L, D = encoder_out.shape
    _, h = decoder_out.shape
    A = params["w_enc"].shape[0]
    f32 = jnp.float32

    # ---- batch block size (primary tuning knob) ---------------------------
    bm = min(block_m, M)
    if bm < M:
        # Blocked path: keep bm a multiple of 8 so the (bm, ...) blocks stay
        # sublane-aligned; the ragged last block is handled by masked writes.
        bm = max(8, (bm // 8) * 8)
    elif M > 8:
        # Whole batch would fit one step: split into >=2 blocks so v7x's two
        # TensorCores both get work on the "parallel" grid axis.
        half = -(-M // 2)            # ceil(M / 2)
        half = -(-half // 8) * 8     # round up to a multiple of 8
        if half < M:
            bm = half
    n_blocks = pl.cdiv(M, bm)
    # NOTE: no wrapper-side jnp.pad of encoder_out (that was a full extra
    # HBM read+write pass of the dominant tensor). OOB rows of the ragged
    # last block are per-row independent garbage and their writes are masked.

    # ---- grid-invariant weight prep (hoisted out of the kernel) -----------
    w_enc_t = params["w_enc"].T.astype(f32)                     # (D, A)
    w_dec_t = params["w_dec"].T.astype(f32)                     # (h, A)
    misc = jnp.stack(
        [params["w_fc"].astype(f32).reshape(A),                 # row 0: w_fc
         (params["b_enc"] + params["b_dec"]).astype(f32).reshape(A)],  # row 1
        axis=0)                                                 # (2, A)
    # b_fc intentionally not passed: softmax is shift-invariant.

    cost = pl.CostEstimate(
        flops=int(2 * M * L * D * A + 2 * M * h * A
                  + 2 * M * L * A + 2 * M * L * D),
        transcendentals=int(M * L),
        bytes_accessed=int(4 * (M * L * D + M * h + D * A + h * A + 2 * A
                                + M * D + M * L)),
    )

    out_w, out_a = pl.pallas_call(
        _attention_kernel,
        out_shape=(jax.ShapeDtypeStruct((M, D), f32),
                   jax.ShapeDtypeStruct((M, L), f32)),
        grid_spec=pltpu.PrefetchScalarGridSpec(
            num_scalar_prefetch=0,
            grid=(n_blocks,),
            in_specs=[
                pl.BlockSpec((bm, L, D), lambda m: (m, 0, 0)),  # encoder_out
                pl.BlockSpec((bm, h), lambda m: (m, 0)),        # decoder_out
                pl.BlockSpec((D, A), lambda m: (0, 0)),         # W_enc^T
                pl.BlockSpec((h, A), lambda m: (0, 0)),         # W_dec^T
                pl.BlockSpec((2, A), lambda m: (0, 0)),         # [w_fc; b_enc+b_dec]
            ],
            out_specs=[
                pl.BlockSpec((bm, D), lambda m: (m, 0)),        # weighted enc
                pl.BlockSpec((bm, L), lambda m: (m, 0)),        # alpha
            ],
        ),
        compiler_params=pltpu.CompilerParams(
            dimension_semantics=("parallel",)),
        cost_estimate=cost,
    )(encoder_out.astype(f32), decoder_out.astype(f32), w_enc_t, w_dec_t, misc)

    return out_w, out_a


def _reference(encoder_out, decoder_out, p):
    enc_attn = encoder_out @ p["w_enc"].T + p["b_enc"]
    dec_attn = decoder_out @ p["w_dec"].T + p["b_dec"]
    hidden = jnp.maximum(enc_attn + dec_attn[:, None, :], 0.0)
    scores = hidden @ p["w_fc"].reshape(-1, 1) + p["b_fc"]
    scores = scores[..., 0]
    alpha = jax.nn.softmax(scores, axis=1)
    weighted = jnp.sum(encoder_out * alpha[..., None], axis=1)
    return weighted, alpha


if __name__ == "__main__":
    # Small, module-consistent shapes. M=10 exercises the ragged-last-block
    # path (bm=8, 2 parallel grid steps, masked writes on the tail block).
    M, L = 10, 16                # batch, feature-map locations
    encoder_size = 32            # D
    decoder_size = 32            # h
    attention_size = 32          # A

    key = jax.random.PRNGKey(0)
    k = jax.random.split(key, 8)

    # Deterministic parameter init (synthetic; no checkpoint load).
    params = {
        "w_enc": 0.1 * jax.random.normal(k[0], (attention_size, encoder_size), jnp.float32),
        "b_enc": 0.1 * jax.random.normal(k[1], (attention_size,), jnp.float32),
        "w_dec": 0.1 * jax.random.normal(k[2], (attention_size, decoder_size), jnp.float32),
        "b_dec": 0.1 * jax.random.normal(k[3], (attention_size,), jnp.float32),
        "w_fc":  0.1 * jax.random.normal(k[4], (attention_size,), jnp.float32),
        "b_fc":  0.1 * jax.random.normal(k[5], (1,), jnp.float32),
    }

    encoder_out = jax.random.normal(k[6], (M, L, encoder_size), jnp.float32)
    decoder_out = jax.random.normal(k[7], (M, decoder_size), jnp.float32)

    weighted, alpha = attention_mechanism(encoder_out, decoder_out, params)
    jax.block_until_ready((weighted, alpha))

    ref_w, ref_a = _reference(encoder_out, decoder_out, params)
    assert weighted.shape == (M, encoder_size) and alpha.shape == (M, L)
    assert jnp.allclose(weighted, ref_w, atol=1e-5, rtol=1e-5)
    assert jnp.allclose(alpha, ref_a, atol=1e-5, rtol=1e-5)
    # alpha rows should sum to ~1
    assert jnp.allclose(jnp.sum(alpha, axis=-1), jnp.ones((M,)), atol=1e-5)

    print("KERNEL_OK")
</pallas_src>

<mosaic_0001>
module attributes {stable_mosaic.version = 11 : i64} {
  func.func @_attention_kernel(%arg0: i32, %arg1: memref<8x16x32xf32, #tpu.memory_space<vmem>>, %arg2: memref<8x32xf32, #tpu.memory_space<vmem>>, %arg3: memref<32x32xf32, #tpu.memory_space<vmem>>, %arg4: memref<32x32xf32, #tpu.memory_space<vmem>>, %arg5: memref<2x32xf32, #tpu.memory_space<vmem>>, %arg6: memref<8x32xf32, #tpu.memory_space<vmem>>, %arg7: memref<8x16xf32, #tpu.memory_space<vmem>>) attributes {dimension_semantics = [#tpu.dimension_semantics<parallel>], iteration_bounds = array<i64: 2>, scalar_prefetch = 0 : i64, scratch_operands = 0 : i64, tpu.core_type = #tpu.core_type<tc>, window_params = [{transform_indices = @transform_0, window_bounds = array<i64: 8, 16, 32>}, {transform_indices = @transform_1, window_bounds = array<i64: 8, 32>}, {pipeline_mode = #tpu.pipeline_mode<synchronous>, transform_indices = @transform_2, window_bounds = array<i64: 32, 32>}, {pipeline_mode = #tpu.pipeline_mode<synchronous>, transform_indices = @transform_3, window_bounds = array<i64: 32, 32>}, {pipeline_mode = #tpu.pipeline_mode<synchronous>, transform_indices = @transform_4, window_bounds = array<i64: 2, 32>}, {transform_indices = @transform_5, window_bounds = array<i64: 8, 32>}, {transform_indices = @transform_6, window_bounds = array<i64: 8, 16>}]} {
    %c0 = arith.constant 0 : index
    %c0_0 = arith.constant 0 : index
    %c0_1 = arith.constant 0 : index
    %0 = vector.load %arg1[%c0, %c0_0, %c0_1] : memref<8x16x32xf32, #tpu.memory_space<vmem>>, vector<8x16x32xf32>
    %1 = vector.shape_cast %0 : vector<8x16x32xf32> to vector<128x32xf32>
    %c0_2 = arith.constant 0 : index
    %c0_3 = arith.constant 0 : index
    %2 = vector.load %arg3[%c0_2, %c0_3] : memref<32x32xf32, #tpu.memory_space<vmem>>, vector<32x32xf32>
    %cst = arith.constant dense<0.000000e+00> : vector<128x32xf32>
    %3 = tpu.matmul %1, %2, %cst {dimension_numbers = #tpu.dot_dimension_numbers<[1], [0], [0], [1], [0, 0, 1, 1], [], []>} : vector<128x32xf32>, vector<32x32xf32>, vector<128x32xf32> -> vector<128x32xf32>
    %4 = vector.shape_cast %3 : vector<128x32xf32> to vector<8x16x32xf32>
    %c0_4 = arith.constant 0 : index
    %c0_5 = arith.constant 0 : index
    %5 = vector.load %arg2[%c0_4, %c0_5] : memref<8x32xf32, #tpu.memory_space<vmem>>, vector<8x32xf32>
    %c0_6 = arith.constant 0 : index
    %c0_7 = arith.constant 0 : index
    %6 = vector.load %arg4[%c0_6, %c0_7] : memref<32x32xf32, #tpu.memory_space<vmem>>, vector<32x32xf32>
    %cst_8 = arith.constant dense<0.000000e+00> : vector<8x32xf32>
    %7 = tpu.matmul %5, %6, %cst_8 {dimension_numbers = #tpu.dot_dimension_numbers<[1], [0], [0], [1], [0, 0, 1, 1], [], []>} : vector<8x32xf32>, vector<32x32xf32>, vector<8x32xf32> -> vector<8x32xf32>
    %c1 = arith.constant 1 : index
    %c0_9 = arith.constant 0 : index
    %8 = vector.load %arg5[%c1, %c0_9] : memref<2x32xf32, #tpu.memory_space<vmem>>, vector<1x32xf32>
    %9 = vector.broadcast %8 : vector<1x32xf32> to vector<8x32xf32>
    %10 = arith.addf %7, %9 : vector<8x32xf32>
    %11 = vector.shape_cast %10 : vector<8x32xf32> to vector<8x1x32xf32>
    %12 = vector.broadcast %11 : vector<8x1x32xf32> to vector<8x16x32xf32>
    %13 = arith.addf %4, %12 : vector<8x16x32xf32>
    %cst_10 = arith.constant 0.000000e+00 : f32
    %14 = vector.broadcast %cst_10 : f32 to vector<8x16x32xf32>
    %15 = arith.maximumf %13, %14 : vector<8x16x32xf32>
    %c0_11 = arith.constant 0 : index
    %c0_12 = arith.constant 0 : index
    %16 = vector.load %arg5[%c0_11, %c0_12] : memref<2x32xf32, #tpu.memory_space<vmem>>, vector<1x32xf32>
    %17 = vector.shape_cast %16 : vector<1x32xf32> to vector<1x1x32xf32>
    %18 = vector.broadcast %17 : vector<1x1x32xf32> to vector<8x16x32xf32>
    %19 = arith.mulf %15, %18 : vector<8x16x32xf32>
    %cst_13 = arith.constant dense<0.000000e+00> : vector<8x16xf32>
    %20 = vector.multi_reduction <add>, %19, %cst_13 [2] : vector<8x16x32xf32> to vector<8x16xf32>
    %cst_14 = arith.constant dense<0xFF800000> : vector<8xf32>
    %21 = vector.multi_reduction <maximumf>, %20, %cst_14 [1] : vector<8x16xf32> to vector<8xf32>
    %22 = vector.shape_cast %21 : vector<8xf32> to vector<8x1xf32>
    %23 = vector.broadcast %22 : vector<8x1xf32> to vector<8x16xf32>
    %24 = arith.subf %20, %23 : vector<8x16xf32>
    %25 = math.exp %24 : vector<8x16xf32>
    %cst_15 = arith.constant dense<0.000000e+00> : vector<8xf32>
    %26 = vector.multi_reduction <add>, %25, %cst_15 [1] : vector<8x16xf32> to vector<8xf32>
    %27 = vector.shape_cast %26 : vector<8xf32> to vector<8x1xf32>
    %28 = tpu.reciprocal %27 : vector<8x1xf32> -> vector<8x1xf32>
    %29 = vector.broadcast %28 : vector<8x1xf32> to vector<8x16xf32>
    %30 = arith.mulf %25, %29 : vector<8x16xf32>
    %31 = vector.shape_cast %30 : vector<8x16xf32> to vector<8x16x1xf32>
    %32 = vector.broadcast %31 : vector<8x16x1xf32> to vector<8x16x32xf32>
    %33 = arith.mulf %32, %0 : vector<8x16x32xf32>
    %cst_16 = arith.constant dense<0.000000e+00> : vector<8x32xf32>
    %34 = vector.multi_reduction <add>, %33, %cst_16 [1] : vector<8x16x32xf32> to vector<8x32xf32>
    %c0_17 = arith.constant 0 : index
    %c0_18 = arith.constant 0 : index
    %35 = vector.load %arg6[%c0_17, %c0_18] : memref<8x32xf32, #tpu.memory_space<vmem>>, vector<8x32xf32>
    tpu.vector_store %arg6[%c0_17, %c0_18], %34 {strides = array<i32>} : memref<8x32xf32, #tpu.memory_space<vmem>>, vector<8x32xf32>,
    %c0_19 = arith.constant 0 : index
    %c0_20 = arith.constant 0 : index
    %36 = vector.load %arg7[%c0_19, %c0_20] : memref<8x16xf32, #tpu.memory_space<vmem>>, vector<8x16xf32>
    tpu.vector_store %arg7[%c0_19, %c0_20], %30 {strides = array<i32>} : memref<8x16xf32, #tpu.memory_space<vmem>>, vector<8x16xf32>,
    return
  }
  func.func @transform_0(%arg0: i32) -> (i32, i32, i32) {
    %c0_i32 = arith.constant 0 : i32
    %c0_i32_0 = arith.constant 0 : i32
    %c0_i32_1 = arith.constant 0 : i32
    return %arg0, %c0_i32, %c0_i32_0 : i32, i32, i32
  }
  func.func @transform_1(%arg0: i32) -> (i32, i32) {
    %c0_i32 = arith.constant 0 : i32
    %c0_i32_0 = arith.constant 0 : i32
    return %arg0, %c0_i32 : i32, i32
  }
  func.func @transform_2(%arg0: i32) -> (i32, i32) {
    %c0_i32 = arith.constant 0 : i32
    %c0_i32_0 = arith.constant 0 : i32
    %c0_i32_1 = arith.constant 0 : i32
    return %c0_i32, %c0_i32_0 : i32, i32
  }
  func.func @transform_3(%arg0: i32) -> (i32, i32) {
    %c0_i32 = arith.constant 0 : i32
    %c0_i32_0 = arith.constant 0 : i32
    %c0_i32_1 = arith.constant 0 : i32
    return %c0_i32, %c0_i32_0 : i32, i32
  }
  func.func @transform_4(%arg0: i32) -> (i32, i32) {
    %c0_i32 = arith.constant 0 : i32
    %c0_i32_0 = arith.constant 0 : i32
    %c0_i32_1 = arith.constant 0 : i32
    return %c0_i32, %c0_i32_0 : i32, i32
  }
  func.func @transform_5(%arg0: i32) -> (i32, i32) {
    %c0_i32 = arith.constant 0 : i32
    %c0_i32_0 = arith.constant 0 : i32
    return %arg0, %c0_i32 : i32, i32
  }
  func.func @transform_6(%arg0: i32) -> (i32, i32) {
    %c0_i32 = arith.constant 0 : i32
    %c0_i32_0 = arith.constant 0 : i32
    return %arg0, %c0_i32 : i32, i32
  }
}

</mosaic_0001>

<llo_original>
// kernel: tpu_custom_call.1
$region0: #{tpu_custom_call.1}
  #allocation0 [shape = 'u32[]', space=smem, size = 0x4, offset = 0x4, fixed_abs, tag = 'smem constant byte address 0x4 - core index']
  #allocation1 [shape = 'u32[72,128]{1,0:T(1,128)}', space=vmem, size = 0x9000, scoped, tag = 'internal scratch']
  %s0 = inlined_call_operand.hbm [shape: f32[10,16,32], index: 0, kind: input, shape index: {}]
  %s1 = inlined_call_operand.hbm [shape: f32[10,32], index: 1, kind: input, shape index: {}]
  %s2 = inlined_call_operand.hbm [shape: f32[32,32], index: 2, kind: input, shape index: {}]
  %s3 = inlined_call_operand.hbm [shape: f32[32,32], index: 3, kind: input, shape index: {}]
  %s4 = inlined_call_operand.vmem [shape: f32[2,32], index: 4, kind: input, shape index: {}]
  %s5 = inlined_call_operand.hbm [shape: f32[10,32], index: 5, kind: output, shape index: {0}]
  %s6 = inlined_call_operand.hbm [shape: f32[10,16], index: 6, kind: output, shape index: {1}]
  %7 = xla_tuple %s5, %s6
  %s8 = sld [smem:[#allocation0]]
  $region77: #{tpu_custom_call.1} parent=0
    _
  %s10 = ssub.s32 1, %s8
  %s11 = scalar_select 0, %s10, %s8
  $region1: #{tpu_custom_call.1} parent=0
    #allocation2 [shape = 'u8[131072]{0}', space=vmem, size = 0x20000, scoped, tag = 'input window, operand 0']
    #allocation3 [shape = 's32[2]{0}', space=sflag, size = 0x8, scoped, tag = 'scoped memory for tpu_custom_call.1']
    #allocation4 [shape = 's32[2]{0}', space=sflag, size = 0x8, scoped, tag = 'scoped memory for tpu_custom_call.1']
    #allocation5 [shape = 'u8[8192]{0}', space=vmem, size = 0x2000, scoped, tag = 'input window, operand 1']
    #allocation6 [shape = 's32[2]{0}', space=sflag, size = 0x8, scoped, tag = 'scoped memory for tpu_custom_call.1']
    #allocation7 [shape = 'u8[16384]{0}', space=vmem, size = 0x4000, scoped, tag = 'input window, operand 2, single buffered']
    #allocation8 [shape = 'u8[16384]{0}', space=vmem, size = 0x4000, scoped, tag = 'input window, operand 3, single buffered']
    #allocation9 [shape = 's32[1]{0}', space=sflag, size = 0x4, scoped, tag = 'scoped memory for tpu_custom_call.1']
    #allocation10 [shape = 'u8[8192]{0}', space=vmem, size = 0x2000, scoped, tag = 'output window, operand 0']
    #allocation11 [shape = 'u8[8192]{0}', space=vmem, size = 0x2000, scoped, tag = 'output window, operand 1']
    #allocation12 [shape = 's32[2]{0}', space=sflag, size = 0x8, scoped, tag = 'scoped memory for tpu_custom_call.1']
    %12 = vsyncpa [#allocation3], 0
    %s13 = scalar_lea.sflag [#allocation3], 1
    %14 = vsyncpa %s13, 0
    %15 = vsyncpa [#allocation6], 0
    %s16 = scalar_lea.sflag [#allocation6], 1
    %17 = vsyncpa %s16, 0
    %18 = vsyncpa [#allocation9], 0
    %19 = vsyncpa [#allocation4], 0
    %s20 = scalar_lea.sflag [#allocation4], 1
    %21 = vsyncpa %s20, 0
    %22 = vsyncpa [#allocation12], 0
    %s23 = scalar_lea.sflag [#allocation12], 1
    %24 = vsyncpa %s23, 0
    loop: start=0, step=1, limit=4
    $region2: #{tpu_custom_call.1} parent=1 // loop_pre_header
      _
    $region3: #{tpu_custom_call.1} parent=1 // loop_header
      %s26 = sphi 0, %s30
      %p27 = scmp.ge.s32.totalorder %s26, 4
      %s36 = sphi 0, %s38
      %s39 = sphi 0, %s36
      %s40 = sphi 0, %s39
      %s56 = sphi 0, %s40
      %s62 = sphi 0, %s64
      %s65 = sphi 0, %s62
      %s66 = sphi 0, %s65
      %s82 = sphi 0, %s66
      %s86 = sphi 0, %s86
      %s88 = sphi 0, %s86
      %s89 = sphi 0, %s88
      %s103 = sphi 0, %s89
      %s107 = sphi 0, %s107
      %s109 = sphi 0, %s107
      %s110 = sphi 0, %s109
      %s124 = sphi 0, %s110
      %s128 = sphi 0, %s128
      %s130 = sphi 0, %s128
      %s131 = sphi 0, %s130
      %s145 = sphi 0, %s131
      %s151 = sphi 0, %s153
      %s154 = sphi 0, %s151
      %s155 = sphi 0, %s154
      %s171 = sphi 0, %s155
      %s177 = sphi 0, %s179
      %s180 = sphi 0, %s177
      %s181 = sphi 0, %s180
      %s197 = sphi 0, %s181
    $region4: #{tpu_custom_call.1} parent=1 // loop_header_branch
      %29 = sbr.rel (%p27) target = $region8
    $region5: #{tpu_custom_call.1} parent=1 // loop_body
      %s31 = ssub.s32 %s26, 1
      %s32 = ssub.s32 %s26, 2
      %s33 = sadd.s32 %s26, 1
      %s34 = ssub.s32 %s26, %s33
      %p35 = scmp.eq.s32.totalorder %s34, 0
      %s37 = sadd.s32 %s36, 1
      %s38 = scalar_select %p35, %s36, %s37
      %p41 = pneg %p35
      %p42 = scmp.eq.s32.totalorder %s26, 1
      %p43 = por %p41, %p42
      %p44 = scmp.ne.s32.totalorder %s36, %s39
      %p45 = scmp.eq.s32.totalorder %s26, 0
      %p46 = por %p44, %p45
      %p47 = scmp.ne.s32.totalorder %s36, %s39
      %p48 = scmp.eq.s32.totalorder %s31, 1
      %p49 = por %p47, %p48
      %p50 = scmp.ne.s32.totalorder %s39, %s40
      %p51 = scmp.eq.s32.totalorder %s31, 0
      %p52 = por %p50, %p51
      %p53 = scmp.ne.s32.totalorder %s39, %s40
      %p54 = scmp.eq.s32.totalorder %s32, 1
      %p55 = por %p53, %p54
      %p57 = scmp.ne.s32.totalorder %s40, %s56
      %p58 = scmp.eq.s32.totalorder %s32, 0
      %p59 = por %p57, %p58
      %s60 = ssub.s32 %s26, %s33
      %p61 = scmp.eq.s32.totalorder %s60, 0
      %s63 = sadd.s32 %s62, 1
      %s64 = scalar_select %p61, %s62, %s63
      %p67 = pneg %p61
      %p68 = scmp.eq.s32.totalorder %s26, 1
      %p69 = por %p67, %p68
      %p70 = scmp.ne.s32.totalorder %s62, %s65
      %p71 = scmp.eq.s32.totalorder %s26, 0
      %p72 = por %p70, %p71
      %p73 = scmp.ne.s32.totalorder %s62, %s65
      %p74 = scmp.eq.s32.totalorder %s31, 1
      %p75 = por %p73, %p74
      %p76 = scmp.ne.s32.totalorder %s65, %s66
      %p77 = scmp.eq.s32.totalorder %s31, 0
      %p78 = por %p76, %p77
      %p79 = scmp.ne.s32.totalorder %s65, %s66
      %p80 = scmp.eq.s32.totalorder %s32, 1
      %p81 = por %p79, %p80
      %p83 = scmp.ne.s32.totalorder %s66, %s82
      %p84 = scmp.eq.s32.totalorder %s32, 0
      %p85 = por %p83, %p84
      %s87 = sadd.s32 %s86, 1
      %p90 = scmp.eq.s32.totalorder %s26, 1
      %p91 = scmp.ne.s32.totalorder %s86, %s88
      %p92 = scmp.eq.s32.totalorder %s26, 0
      %p93 = por %p91, %p92
      %p94 = scmp.ne.s32.totalorder %s86, %s88
      %p95 = scmp.eq.s32.totalorder %s31, 1
      %p96 = por %p94, %p95
      %p97 = scmp.ne.s32.totalorder %s88, %s89
      %p98 = scmp.eq.s32.totalorder %s31, 0
      %p99 = por %p97, %p98
      %p100 = scmp.ne.s32.totalorder %s88, %s89
      %p101 = scmp.eq.s32.totalorder %s32, 1
      %p102 = por %p100, %p101
      %p104 = scmp.ne.s32.totalorder %s89, %s103
      %p105 = scmp.eq.s32.totalorder %s32, 0
      %p106 = por %p104, %p105
      %s108 = sadd.s32 %s107, 1
      %p111 = scmp.eq.s32.totalorder %s26, 1
      %p112 = scmp.ne.s32.totalorder %s107, %s109
      %p113 = scmp.eq.s32.totalorder %s26, 0
      %p114 = por %p112, %p113
      %p115 = scmp.ne.s32.totalorder %s107, %s109
      %p116 = scmp.eq.s32.totalorder %s31, 1
      %p117 = por %p115, %p116
      %p118 = scmp.ne.s32.totalorder %s109, %s110
      %p119 = scmp.eq.s32.totalorder %s31, 0
      %p120 = por %p118, %p119
      %p121 = scmp.ne.s32.totalorder %s109, %s110
      %p122 = scmp.eq.s32.totalorder %s32, 1
      %p123 = por %p121, %p122
      %p125 = scmp.ne.s32.totalorder %s110, %s124
      %p126 = scmp.eq.s32.totalorder %s32, 0
      %p127 = por %p125, %p126
      %s129 = sadd.s32 %s128, 1
      %p132 = scmp.eq.s32.totalorder %s26, 1
      %p133 = scmp.ne.s32.totalorder %s128, %s130
      %p134 = scmp.eq.s32.totalorder %s26, 0
      %p135 = por %p133, %p134
      %p136 = scmp.ne.s32.totalorder %s128, %s130
      %p137 = scmp.eq.s32.totalorder %s31, 1
      %p138 = por %p136, %p137
      %p139 = scmp.ne.s32.totalorder %s130, %s131
      %p140 = scmp.eq.s32.totalorder %s31, 0
      %p141 = por %p139, %p140
      %p142 = scmp.ne.s32.totalorder %s130, %s131
      %p143 = scmp.eq.s32.totalorder %s32, 1
      %p144 = por %p142, %p143
      %p146 = scmp.ne.s32.totalorder %s131, %s145
      %p147 = scmp.eq.s32.totalorder %s32, 0
      %p148 = por %p146, %p147
      %s149 = ssub.s32 %s26, %s33
      %p150 = scmp.eq.s32.totalorder %s149, 0
      %s152 = sadd.s32 %s151, 1
      %s153 = scalar_select %p150, %s151, %s152
      %p156 = pneg %p150
      %p157 = scmp.eq.s32.totalorder %s26, 1
      %p158 = por %p156, %p157
      %p159 = scmp.ne.s32.totalorder %s151, %s154
      %p160 = scmp.eq.s32.totalorder %s26, 0
      %p161 = por %p159, %p160
      %p162 = scmp.ne.s32.totalorder %s151, %s154
      %p163 = scmp.eq.s32.totalorder %s31, 1
      %p164 = por %p162, %p163
      %p165 = scmp.ne.s32.totalorder %s154, %s155
      %p166 = scmp.eq.s32.totalorder %s31, 0
      %p167 = por %p165, %p166
      %p168 = scmp.ne.s32.totalorder %s154, %s155
      %p169 = scmp.eq.s32.totalorder %s32, 1
      %p170 = por %p168, %p169
      %p172 = scmp.ne.s32.totalorder %s155, %s171
      %p173 = scmp.eq.s32.totalorder %s32, 0
      %p174 = por %p172, %p173
      %s175 = ssub.s32 %s26, %s33
      %p176 = scmp.eq.s32.totalorder %s175, 0
      %s178 = sadd.s32 %s177, 1
      %s179 = scalar_select %p176, %s177, %s178
      %p182 = pneg %p176
      %p183 = scmp.eq.s32.totalorder %s26, 1
      %p184 = por %p182, %p183
      %p185 = scmp.ne.s32.totalorder %s177, %s180
      %p186 = scmp.eq.s32.totalorder %s26, 0
      %p187 = por %p185, %p186
      %p188 = scmp.ne.s32.totalorder %s177, %s180
      %p189 = scmp.eq.s32.totalorder %s31, 1
      %p190 = por %p188, %p189
      %p191 = scmp.ne.s32.totalorder %s180, %s181
      %p192 = scmp.eq.s32.totalorder %s31, 0
      %p193 = por %p191, %p192
      %p194 = scmp.ne.s32.totalorder %s180, %s181
      %p195 = scmp.eq.s32.totalorder %s32, 1
      %p196 = por %p194, %p195
      %p198 = scmp.ne.s32.totalorder %s181, %s197
      %p199 = scmp.eq.s32.totalorder %s32, 0
      %p200 = por %p198, %p199
      %p201 = scmp.le.s32.totalorder 1, %s26
      %p202 = scmp.lt.s32.totalorder %s26, 3
      %p203 = pnand %p201, %p202
      %p204 = pneg %p203
      // Predicated region
      $region9: #{tpu_custom_call.1} parent=5 // pred_check
        _
      $region10: #{tpu_custom_call.1} parent=5 // pred_check_branch
        %206 = sbr.rel (%p203) target = $region12
      $region11: #{tpu_custom_call.1} parent=5 // pred_region
        %s207 = ssub.s32 %s26, 1
        // Predicated region
        $region13: #{tpu_custom_call.1} parent=11 // pred_check
          %p208 = pneg %p99
        $region14: #{tpu_custom_call.1} parent=11 // pred_check_branch
          %210 = sbr.rel (%p208) target = $region16
        $region15: #{tpu_custom_call.1} parent=11 // pred_region
          %212 = vsyncadd [#allocation6], 0
          %s213 = sshll.u32 %s2, 4
          %s214 = int_to_ptr.hbm [resolvable:$true] %s213
          %s215 = sshll.u32 [#allocation7], 4
          %s216 = int_to_ptr.vmem [resolvable:$true] %s215
          %221 = dma.hbm_to_vmem [thread:$0]  %s214, 512, %s216, [#allocation6], 128, 128, 8
        $region16: #{tpu_custom_call.1} parent=11 // pred_fallthru
          _
        // Predicated region
        $region17: #{tpu_custom_call.1} parent=11 // pred_check
          %p222 = pneg %p120
        $region18: #{tpu_custom_call.1} parent=11 // pred_check_branch
          %224 = sbr.rel (%p222) target = $region20
        $region19: #{tpu_custom_call.1} parent=11 // pred_region
          %226 = vsyncadd [#allocation9], 0
          %s227 = sshll.u32 %s3, 4
          %s228 = int_to_ptr.hbm [resolvable:$true] %s227
          %s229 = sshll.u32 [#allocation8], 4
          %s230 = int_to_ptr.vmem [resolvable:$true] %s229
          %235 = dma.hbm_to_vmem [thread:$0]  %s228, 512, %s230, [#allocation9], 128, 128, 8
        $region20: #{tpu_custom_call.1} parent=11 // pred_fallthru
          _
        // Predicated region
        $region21: #{tpu_custom_call.1} parent=11 // pred_check
          %p236 = pneg %p141
        $region22: #{tpu_custom_call.1} parent=11 // pred_check_branch
          %238 = sbr.rel (%p236) target = $region24
        $region23: #{tpu_custom_call.1} parent=11 // pred_region
          _
        $region24: #{tpu_custom_call.1} parent=11 // pred_fallthru
          _
      $region12: #{tpu_custom_call.1} parent=5 // pred_fallthru
        _
      %p239 = scmp.lt.s32.totalorder %s26, 2
      // Predicated region
      $region25: #{tpu_custom_call.1} parent=5 // pred_check
        %p240 = pneg %p239
      $region26: #{tpu_custom_call.1} parent=5 // pred_check_branch
        %242 = sbr.rel (%p240) target = $region28
      $region27: #{tpu_custom_call.1} parent=5 // pred_region
        // Predicated region
        $region29: #{tpu_custom_call.1} parent=27 // pred_check
          %p243 = pneg %p46
        $region30: #{tpu_custom_call.1} parent=27 // pred_check_branch
          %245 = sbr.rel (%p243) target = $region32
        $region31: #{tpu_custom_call.1} parent=27 // pred_region
          %s246 = sand.u32 %s36, 1
          %s247 = scalar_lea.sflag [#allocation3], %s246
          %s248 = sand.u32 %s36, 1
          %s249 = smul.addr %s248, 128
          %s250 = scalar_lea.vmem [#allocation2], %s249
          %s251 = smul.u32 8, %s26
          %s252 = ssub.s32 10, %s251
          %p253 = scmp.lt.s32.totalorder %s252, 8
          %s254 = scalar_select %p253, %s252, 8
          %s255 = smul.u32 8, %s254
          %s256 = smul.u32 %s255, 2
          %s257 = ssub.s32 128, %s256
          %s258 = sshll.u32 %s257, 4
          %259 = vsyncadd %s247, %s258
          %p260 = scmp.ne.s32.totalorder 0, %s256
          %s261 = smul.addr %s251, 2
          %s262 = smul.addr %s261, 8
          %s263 = scalar_lea.hbm %s0, %s262
          %s264 = smul.u32 %s254, 2
          %s265 = smul.u32 8, %s264
          %s266 = sshll.u32 %s263, 4
          %s267 = int_to_ptr.hbm [resolvable:$true] %s266
          %s268 = sshll.u32 %s250, 4
          %s269 = int_to_ptr.vmem [resolvable:$true] %s268
          %s270 = sshll.u32 %s265, 4
          %274 = dma.hbm_to_vmem [thread:$0]  (%p260), %s267, %s270, %s269, %s247, 128, 128, 8
        $region32: #{tpu_custom_call.1} parent=27 // pred_fallthru
          _
        // Predicated region
        $region33: #{tpu_custom_call.1} parent=27 // pred_check
          %p275 = pneg %p72
        $region34: #{tpu_custom_call.1} parent=27 // pred_check_branch
          %277 = sbr.rel (%p275) target = $region36
        $region35: #{tpu_custom_call.1} parent=27 // pred_region
          %s278 = sand.u32 %s26, 1
          %s279 = scalar_lea.sflag [#allocation6], %s278
          %s280 = sand.u32 %s62, 1
          %s281 = smul.addr %s280, 8
          %s282 = scalar_lea.vmem [#allocation5], %s281
          %284 = vsyncadd %s279, 0
          %s285 = smul.addr %s26, 8
          %s286 = scalar_lea.hbm %s1, %s285
          %s288 = sshll.u32 %s286, 4
          %s289 = int_to_ptr.hbm [resolvable:$true] %s288
          %s290 = sshll.u32 %s282, 4
          %s291 = int_to_ptr.vmem [resolvable:$true] %s290
          %293 = dma.hbm_to_vmem [thread:$0]  %s289, 128, %s291, %s279
        $region36: #{tpu_custom_call.1} parent=27 // pred_fallthru
          _
      $region28: #{tpu_custom_call.1} parent=5 // pred_fallthru
        _
      %p294 = scmp.le.s32.totalorder 1, %s26
      %p295 = scmp.lt.s32.totalorder %s26, 3
      %p296 = pnand %p294, %p295
      %p297 = pneg %p296
      // Predicated region
      $region37: #{tpu_custom_call.1} parent=5 // pred_check
        _
      $region38: #{tpu_custom_call.1} parent=5 // pred_check_branch
        %299 = sbr.rel (%p296) target = $region40
      $region39: #{tpu_custom_call.1} parent=5 // pred_region
        %s300 = ssub.s32 %s26, 1
        %s301 = sand.u32 %s39, 1
        %s302 = scalar_lea.sflag [#allocation3], %s301
        %s303 = sand.u32 %s39, 1
        %s304 = smul.addr %s303, 128
        %s305 = scalar_lea.vmem [#allocation2], %s304
        // Predicated region
        $region41: #{tpu_custom_call.1} parent=39 // pred_check
          %p306 = pneg %p52
        $region42: #{tpu_custom_call.1} parent=39 // pred_check_branch
          %308 = sbr.rel (%p306) target = $region44
        $region43: #{tpu_custom_call.1} parent=39 // pred_region
          %310 = dma.done %s302, 2048
        $region44: #{tpu_custom_call.1} parent=39 // pred_fallthru
          _
        %s311 = sand.u32 %s31, 1
        %s312 = scalar_lea.sflag [#allocation6], %s311
        %s313 = sand.u32 %s65, 1
        %s314 = smul.addr %s313, 8
        %s315 = scalar_lea.vmem [#allocation5], %s314
        // Predicated region
        $region45: #{tpu_custom_call.1} parent=39 // pred_check
          %p316 = pneg %p78
        $region46: #{tpu_custom_call.1} parent=39 // pred_check_branch
          %318 = sbr.rel (%p316) target = $region48
        $region47: #{tpu_custom_call.1} parent=39 // pred_region
          %320 = dma.done %s312, 128
        $region48: #{tpu_custom_call.1} parent=39 // pred_fallthru
          _
        // Predicated region
        $region49: #{tpu_custom_call.1} parent=39 // pred_check
          %p321 = pneg %p99
        $region50: #{tpu_custom_call.1} parent=39 // pred_check_branch
          %323 = sbr.rel (%p321) target = $region52
        $region51: #{tpu_custom_call.1} parent=39 // pred_region
          %325 = dma.done [#allocation6], 512
        $region52: #{tpu_custom_call.1} parent=39 // pred_fallthru
          _
        // Predicated region
        $region53: #{tpu_custom_call.1} parent=39 // pred_check
          %p326 = pneg %p120
        $region54: #{tpu_custom_call.1} parent=39 // pred_check_branch
          %328 = sbr.rel (%p326) target = $region56
        $region55: #{tpu_custom_call.1} parent=39 // pred_region
          %330 = dma.done [#allocation9], 512
        $region56: #{tpu_custom_call.1} parent=39 // pred_fallthru
          _
        %s331 = sand.u32 %s39, 1
        %s332 = scalar_lea.sflag [#allocation3], %s331
        %s333 = sand.u32 %s39, 1
        %s334 = smul.addr %s333, 128
        %s335 = scalar_lea.vmem [#allocation2], %s334
        %p336 = pneg %p52
        %p337 = pneg %p49
        %s338 = sand.u32 %s31, 1
        %s339 = scalar_lea.sflag [#allocation6], %s338
        %s340 = sand.u32 %s65, 1
        %s341 = smul.addr %s340, 8
        %s342 = scalar_lea.vmem [#allocation5], %s341
        %p343 = pneg %p78
        %p344 = pneg %p75
        %p345 = pneg %p99
        %p346 = pneg %p96
        %p347 = pneg %p120
        %p348 = pneg %p117
        %p349 = pneg %p141
        %p350 = pneg %p138
        %p351 = pneg %p167
        %p352 = pneg %p164
        %s353 = sand.u32 %s154, 1
        %s354 = scalar_lea.sflag [#allocation4], %s353
        %s355 = sand.u32 %s154, 1
        %s356 = smul.addr %s355, 8
        %s357 = scalar_lea.vmem [#allocation10], %s356
        %p358 = pneg %p193
        %p359 = pneg %p190
        %s360 = sand.u32 %s180, 1
        %s361 = scalar_lea.sflag [#allocation12], %s360
        %s362 = sand.u32 %s180, 1
        %s363 = smul.addr %s362, 8
        %s364 = scalar_lea.vmem [#allocation11], %s363
        %s365 = smul.u32 8, %s31
        %s366 = ssub.s32 10, %s365
        %p367 = scmp.lt.s32.totalorder %s366, 8
        %s368 = scalar_select %p367, %s366, 8
        %s369 = smul.u32 8, %s368
        %s370 = smul.u32 %s369, 2
        %v371 = vld [vmem:[%s305] sm:$0xff]
        %v372 = vld [vmem:[%s305 + $0x8] sm:$0xff]
        %v373 = vld [vmem:[%s305 + $0x10] sm:$0xff]
        %v374 = vld [vmem:[%s305 + $0x18] sm:$0xff]
        %v375 = vld [vmem:[%s305 + $0x20] sm:$0xff]
        %v376 = vld [vmem:[%s305 + $0x28] sm:$0xff]
        %v377 = vld [vmem:[%s305 + $0x30] sm:$0xff]
        %v378 = vld [vmem:[%s305 + $0x38] sm:$0xff]
        %v379 = vld [vmem:[%s305 + $0x40] sm:$0xff]
        %v380 = vld [vmem:[%s305 + $0x48] sm:$0xff]
        %v381 = vld [vmem:[%s305 + $0x50] sm:$0xff]
        %v382 = vld [vmem:[%s305 + $0x58] sm:$0xff]
        %v383 = vld [vmem:[%s305 + $0x60] sm:$0xff]
        %v384 = vld [vmem:[%s305 + $0x68] sm:$0xff]
        %v385 = vld [vmem:[%s305 + $0x70] sm:$0xff]
        %v386 = vld [vmem:[%s305 + $0x78] sm:$0xff]
        %v387 = vld [vmem:[#allocation7] sm:$0xff]
        %v388 = vld [vmem:[#allocation7 + $0x8] sm:$0xff]
        %v389 = vld [vmem:[#allocation7 + $0x10] sm:$0xff]
        %v390 = vld [vmem:[#allocation7 + $0x18] sm:$0xff]
        %vm391 = vcmask 261120
        %v393 = vsel %vm391, %v371, 0
        %v396 = vsel %vm391, %v372, 0
        %v399 = vsel %vm391, %v373, 0
        %v402 = vsel %vm391, %v374, 0
        %v405 = vsel %vm391, %v375, 0
        %v408 = vsel %vm391, %v376, 0
        %v411 = vsel %vm391, %v377, 0
        %v414 = vsel %vm391, %v378, 0
        %v417 = vsel %vm391, %v379, 0
        %v420 = vsel %vm391, %v380, 0
        %v423 = vsel %vm391, %v381, 0
        %v426 = vsel %vm391, %v382, 0
        %v429 = vsel %vm391, %v383, 0
        %v432 = vsel %vm391, %v384, 0
        %v435 = vsel %vm391, %v385, 0
        %v438 = vsel %vm391, %v386, 0
        %440 = vmatpush.msra.mxu0 0.0
        %441 = vmatpush.msra.mxu0 0.0
        %442 = vmatpush.msra.mxu0 0.0
        %443 = vmatpush.msra.mxu0 0.0
        %444 = vmatpush.msra.mxu0 0.0
        %445 = vmatpush.msra.mxu0 0.0
        %446 = vmatpush.msra.mxu0 0.0
        %447 = vmatpush.msra.mxu0 0.0
        %448 = vmatpush.msra.mxu0 0.0
        %449 = vmatpush.msra.mxu0 0.0
        %450 = vmatpush.msra.mxu0 0.0
        %451 = vmatpush.msra.mxu0 0.0
        %452 = vmatpush.msra.mxu0 %v390
        %453 = vmatpush.msra.mxu0 %v389
        %454 = vmatpush.msra.mxu0 %v388
        %455 = vmatpush.msra.mxu0 %v387
        %456 = vmatmul.f32.gmra.mxu0 %v393
        %v457 = vpop.f32.mrf.mxu0
        %v458 = vadd.f32 0.0, %v457
        %459 = vmatmul.f32.gmra.mxu0 %v396
        %v460 = vpop.f32.mrf.mxu0
        %v461 = vadd.f32 0.0, %v460
        %462 = vmatmul.f32.gmra.mxu0 %v399
        %v463 = vpop.f32.mrf.mxu0
        %v464 = vadd.f32 0.0, %v463
        %465 = vmatmul.f32.gmra.mxu0 %v402
        %v466 = vpop.f32.mrf.mxu0
        %v467 = vadd.f32 0.0, %v466
        %468 = vmatmul.f32.gmra.mxu0 %v405
        %v469 = vpop.f32.mrf.mxu0
        %v470 = vadd.f32 0.0, %v469
        %471 = vmatmul.f32.gmra.mxu0 %v408
        %v472 = vpop.f32.mrf.mxu0
        %v473 = vadd.f32 0.0, %v472
        %474 = vmatmul.f32.gmra.mxu0 %v411
        %v475 = vpop.f32.mrf.mxu0
        %v476 = vadd.f32 0.0, %v475
        %477 = vmatmul.f32.gmra.mxu0 %v414
        %v478 = vpop.f32.mrf.mxu0
        %v479 = vadd.f32 0.0, %v478
        %480 = vmatmul.f32.gmra.mxu0 %v417
        %v481 = vpop.f32.mrf.mxu0
        %v482 = vadd.f32 0.0, %v481
        %483 = vmatmul.f32.gmra.mxu0 %v420
        %v484 = vpop.f32.mrf.mxu0
        %v485 = vadd.f32 0.0, %v484
        %486 = vmatmul.f32.gmra.mxu0 %v423
        %v487 = vpop.f32.mrf.mxu0
        %v488 = vadd.f32 0.0, %v487
        %489 = vmatmul.f32.gmra.mxu0 %v426
        %v490 = vpop.f32.mrf.mxu0
        %v491 = vadd.f32 0.0, %v490
        %492 = vmatmul.f32.gmra.mxu0 %v429
        %v493 = vpop.f32.mrf.mxu0
        %v494 = vadd.f32 0.0, %v493
        %495 = vmatmul.f32.gmra.mxu0 %v432
        %v496 = vpop.f32.mrf.mxu0
        %v497 = vadd.f32 0.0, %v496
        %498 = vmatmul.f32.gmra.mxu0 %v435
        %v499 = vpop.f32.mrf.mxu0
        %v500 = vadd.f32 0.0, %v499
        %501 = vmatmul.f32.gmra.mxu0 %v438
        %v502 = vpop.f32.mrf.mxu0
        %v503 = vadd.f32 0.0, %v502
        %504 = vdwg.mxu0
        %v505 = vld [vmem:[%s315] sm:$0xff]
        %v506 = vld [vmem:[#allocation8] sm:$0xff]
        %v507 = vld [vmem:[#allocation8 + $0x8] sm:$0xff]
        %v508 = vld [vmem:[#allocation8 + $0x10] sm:$0xff]
        %v509 = vld [vmem:[#allocation8 + $0x18] sm:$0xff]
        %v510 = vld [vmem:[%s4 + $0x1] sm:$0x1]
        %v511 = vperm.slane %v510, 0
        %v513 = vsel %vm391, %v505, 0
        %515 = vmatpush.msra.mxu0 0.0
        %516 = vmatpush.msra.mxu0 0.0
        %517 = vmatpush.msra.mxu0 0.0
        %518 = vmatpush.msra.mxu0 0.0
        %519 = vmatpush.msra.mxu0 0.0
        %520 = vmatpush.msra.mxu0 0.0
        %521 = vmatpush.msra.mxu0 0.0
        %522 = vmatpush.msra.mxu0 0.0
        %523 = vmatpush.msra.mxu0 0.0
        %524 = vmatpush.msra.mxu0 0.0
        %525 = vmatpush.msra.mxu0 0.0
        %526 = vmatpush.msra.mxu0 0.0
        %527 = vmatpush.msra.mxu0 %v509
        %528 = vmatpush.msra.mxu0 %v508
        %529 = vmatpush.msra.mxu0 %v507
        %530 = vmatpush.msra.mxu0 %v506
        %531 = vmatmul.f32.gmra.mxu0 %v513
        %v532 = vpop.f32.mrf.mxu0
        %v533 = vadd.f32 %v511, %v532
        %534 = vdwg.mxu0
        %v536 = vrot.slane %v533, 1
        %v537 = vrot.slane %v533, 2
        %v538 = vrot.slane %v533, 3
        %v539 = vrot.slane %v533, 4
        %v540 = vrot.slane %v533, 5
        %v541 = vrot.slane %v533, 6
        %v542 = vrot.slane %v533, 7
        %v543 = vperm.slane %v533, 0
        %v544 = vperm.slane %v536, 0
        %v545 = vperm.slane %v537, 0
        %v546 = vperm.slane %v538, 0
        %v547 = vperm.slane %v539, 0
        %v548 = vperm.slane %v540, 0
        %v549 = vperm.slane %v541, 0
        %v550 = vperm.slane %v542, 0
        %v559 = vadd.f32 %v458, %v543
        %v560 = vadd.f32 %v461, %v543
        %v561 = vadd.f32 %v464, %v544
        %v562 = vadd.f32 %v467, %v544
        %v563 = vadd.f32 %v470, %v545
        %v564 = vadd.f32 %v473, %v545
        %v565 = vadd.f32 %v476, %v546
        %v566 = vadd.f32 %v479, %v546
        %v567 = vadd.f32 %v482, %v547
        %v568 = vadd.f32 %v485, %v547
        %v569 = vadd.f32 %v488, %v548
        %v570 = vadd.f32 %v491, %v548
        %v571 = vadd.f32 %v494, %v549
        %v572 = vadd.f32 %v497, %v549
        %v573 = vadd.f32 %v500, %v550
        %v574 = vadd.f32 %v503, %v550
        %v575 = vmax.f32 %v559, 0.0
        %v576 = vmax.f32 %v560, 0.0
        %v577 = vmax.f32 %v561, 0.0
        %v578 = vmax.f32 %v562, 0.0
        %v579 = vmax.f32 %v563, 0.0
        %v580 = vmax.f32 %v564, 0.0
        %v581 = vmax.f32 %v565, 0.0
        %v582 = vmax.f32 %v566, 0.0
        %v583 = vmax.f32 %v567, 0.0
        %v584 = vmax.f32 %v568, 0.0
        %v585 = vmax.f32 %v569, 0.0
        %v586 = vmax.f32 %v570, 0.0
        %v587 = vmax.f32 %v571, 0.0
        %v588 = vmax.f32 %v572, 0.0
        %v589 = vmax.f32 %v573, 0.0
        %v590 = vmax.f32 %v574, 0.0
        %v591 = vld [vmem:[%s4] sm:$0x1]
        %v592 = vperm.slane %v591, 0
        %v593 = vmul.f32 %v575, %v592
        %v594 = vmul.f32 %v576, %v592
        %v595 = vmul.f32 %v577, %v592
        %v596 = vmul.f32 %v578, %v592
        %v597 = vmul.f32 %v579, %v592
        %v598 = vmul.f32 %v580, %v592
        %v599 = vmul.f32 %v581, %v592
        %v600 = vmul.f32 %v582, %v592
        %v601 = vmul.f32 %v583, %v592
        %v602 = vmul.f32 %v584, %v592
        %v603 = vmul.f32 %v585, %v592
        %v604 = vmul.f32 %v586, %v592
        %v605 = vmul.f32 %v587, %v592
        %v606 = vmul.f32 %v588, %v592
        %v607 = vmul.f32 %v589, %v592
        %v608 = vmul.f32 %v590, %v592
        %v609 = vsel %vm391, %v593, 0.0
        %610 = vadd.xlane.f32.xlu0 %v609
        %v611 = vpop.xlane.xlu0 %610
        %v612 = vsel %vm391, %v594, 0.0
        %613 = vadd.xlane.f32.xlu0 %v612
        %v614 = vpop.xlane.xlu0 %613
        %v615 = vsel %vm391, %v595, 0.0
        %616 = vadd.xlane.f32.xlu0 %v615
        %v617 = vpop.xlane.xlu0 %616
        %v618 = vsel %vm391, %v596, 0.0
        %619 = vadd.xlane.f32.xlu0 %v618
        %v620 = vpop.xlane.xlu0 %619
        %v621 = vsel %vm391, %v597, 0.0
        %622 = vadd.xlane.f32.xlu0 %v621
        %v623 = vpop.xlane.xlu0 %622
        %v624 = vsel %vm391, %v598, 0.0
        %625 = vadd.xlane.f32.xlu0 %v624
        %v626 = vpop.xlane.xlu0 %625
        %v627 = vsel %vm391, %v599, 0.0
        %628 = vadd.xlane.f32.xlu0 %v627
        %v629 = vpop.xlane.xlu0 %628
        %v630 = vsel %vm391, %v600, 0.0
        %631 = vadd.xlane.f32.xlu0 %v630
        %v632 = vpop.xlane.xlu0 %631
        %v633 = vsel %vm391, %v601, 0.0
        %634 = vadd.xlane.f32.xlu0 %v633
        %v635 = vpop.xlane.xlu0 %634
        %v636 = vsel %vm391, %v602, 0.0
        %637 = vadd.xlane.f32.xlu0 %v636
        %v638 = vpop.xlane.xlu0 %637
        %v639 = vsel %vm391, %v603, 0.0
        %640 = vadd.xlane.f32.xlu0 %v639
        %v641 = vpop.xlane.xlu0 %640
        %v642 = vsel %vm391, %v604, 0.0
        %643 = vadd.xlane.f32.xlu0 %v642
        %v644 = vpop.xlane.xlu0 %643
        %v645 = vsel %vm391, %v605, 0.0
        %646 = vadd.xlane.f32.xlu0 %v645
        %v647 = vpop.xlane.xlu0 %646
        %v648 = vsel %vm391, %v606, 0.0
        %649 = vadd.xlane.f32.xlu0 %v648
        %v650 = vpop.xlane.xlu0 %649
        %v651 = vsel %vm391, %v607, 0.0
        %652 = vadd.xlane.f32.xlu0 %v651
        %v653 = vpop.xlane.xlu0 %652
        %v654 = vsel %vm391, %v608, 0.0
        %655 = vadd.xlane.f32.xlu0 %v654
        %v656 = vpop.xlane.xlu0 %655
        %v673 = vlaneseq
        %v674 = vand.u32 %v673, 127
        %v675 = vperm.slane %v611, %v674
        %v676 = vadd.s32 %v674, 4294967288
        %v677 = vperm.slane %v614, %v676
        %vm678 = vcmask 130112
        %v679 = vsel %vm678, %v677, %v675
        %v680 = vperm.slane %v617, %v674
        %v681 = vperm.slane %v620, %v676
        %v682 = vsel %vm678, %v681, %v680
        %v683 = vperm.slane %v623, %v674
        %v684 = vperm.slane %v626, %v676
        %v685 = vsel %vm678, %v684, %v683
        %v686 = vperm.slane %v629, %v674
        %v687 = vperm.slane %v632, %v676
        %v688 = vsel %vm678, %v687, %v686
        %v689 = vperm.slane %v635, %v674
        %v690 = vperm.slane %v638, %v676
        %v691 = vsel %vm678, %v690, %v689
        %v692 = vperm.slane %v641, %v674
        %v693 = vperm.slane %v644, %v676
        %v694 = vsel %vm678, %v693, %v692
        %v695 = vperm.slane %v647, %v674
        %v696 = vperm.slane %v650, %v676
        %v697 = vsel %vm678, %v696, %v695
        %v698 = vperm.slane %v653, %v674
        %v699 = vperm.slane %v656, %v676
        %v700 = vsel %vm678, %v699, %v698
        %vm701 = vcmask 1041409
        %v702 = vsel %vm701, %v682, %v679
        %vm703 = vcmask 1042434
        %v704 = vsel %vm703, %v685, %v702
        %vm705 = vcmask 1043459
        %v706 = vsel %vm705, %v688, %v704
        %vm707 = vcmask 1044484
        %v708 = vsel %vm707, %v691, %v706
        %vm709 = vcmask 1045509
        %v710 = vsel %vm709, %v694, %v708
        %vm711 = vcmask 1046534
        %v712 = vsel %vm711, %v697, %v710
        %vm713 = vcmask 1047559
        %v714 = vsel %vm713, %v700, %v712
        %vm716 = vcmask 130048
        %v717 = vsel %vm716, %v714, -inf
        %718 = vmax.xlane.f32.xlu0 %v717
        %v719 = vpop.xlane.xlu0 %718
        %v721 = vperm.slane %v719, 0
        %v722 = vperm.slane %v719, 1
        %v723 = vperm.slane %v719, 2
        %v724 = vperm.slane %v719, 3
        %v725 = vperm.slane %v719, 4
        %v726 = vperm.slane %v719, 5
        %v727 = vperm.slane %v719, 6
        %v728 = vperm.slane %v719, 7
        %v737 = vsub.f32 %v611, %v721
        %v738 = vsub.f32 %v614, %v721
        %v739 = vsub.f32 %v617, %v722
        %v740 = vsub.f32 %v620, %v722
        %v741 = vsub.f32 %v623, %v723
        %v742 = vsub.f32 %v626, %v723
        %v743 = vsub.f32 %v629, %v724
        %v744 = vsub.f32 %v632, %v724
        %v745 = vsub.f32 %v635, %v725
        %v746 = vsub.f32 %v638, %v725
        %v747 = vsub.f32 %v641, %v726
        %v748 = vsub.f32 %v644, %v726
        %v749 = vsub.f32 %v647, %v727
        %v750 = vsub.f32 %v650, %v727
        %v751 = vsub.f32 %v653, %v728
        %v752 = vsub.f32 %v656, %v728
        %v753 = vmul.f32 %v737, 1.442695
        %v754 = vpow.pop %v753
        %v755 = vmul.f32 %v738, 1.442695
        %v756 = vpow.pop %v755
        %v757 = vmul.f32 %v739, 1.442695
        %v758 = vpow.pop %v757
        %v759 = vmul.f32 %v740, 1.442695
        %v760 = vpow.pop %v759
        %v761 = vmul.f32 %v741, 1.442695
        %v762 = vpow.pop %v761
        %v763 = vmul.f32 %v742, 1.442695
        %v764 = vpow.pop %v763
        %v765 = vmul.f32 %v743, 1.442695
        %v766 = vpow.pop %v765
        %v767 = vmul.f32 %v744, 1.442695
        %v768 = vpow.pop %v767
        %v769 = vmul.f32 %v745, 1.442695
        %v770 = vpow.pop %v769
        %v771 = vmul.f32 %v746, 1.442695
        %v772 = vpow.pop %v771
        %v773 = vmul.f32 %v747, 1.442695
        %v774 = vpow.pop %v773
        %v775 = vmul.f32 %v748, 1.442695
        %v776 = vpow.pop %v775
        %v777 = vmul.f32 %v749, 1.442695
        %v778 = vpow.pop %v777
        %v779 = vmul.f32 %v750, 1.442695
        %v780 = vpow.pop %v779
        %v781 = vmul.f32 %v751, 1.442695
        %v782 = vpow.pop %v781
        %v783 = vmul.f32 %v752, 1.442695
        %v784 = vpow.pop %v783
        %801 = vset.pattern.permute.xlu0 0
        %802 = vperm.xlu0 %801, %v754
        %v803 = vpop.permute.xlu0 %802
        %804 = vset.pattern.permute.xlu0 0
        %805 = vperm.xlu0 %804, %v756
        %v806 = vpop.permute.xlu0 %805
        %807 = vset.pattern.permute.xlu0 0
        %808 = vperm.xlu0 %807, %v758
        %v809 = vpop.permute.xlu0 %808
        %810 = vset.pattern.permute.xlu0 0
        %811 = vperm.xlu0 %810, %v760
        %v812 = vpop.permute.xlu0 %811
        %813 = vset.pattern.permute.xlu0 0
        %814 = vperm.xlu0 %813, %v762
        %v815 = vpop.permute.xlu0 %814
        %816 = vset.pattern.permute.xlu0 0
        %817 = vperm.xlu0 %816, %v764
        %v818 = vpop.permute.xlu0 %817
        %819 = vset.pattern.permute.xlu0 0
        %820 = vperm.xlu0 %819, %v766
        %v821 = vpop.permute.xlu0 %820
        %822 = vset.pattern.permute.xlu0 0
        %823 = vperm.xlu0 %822, %v768
        %v824 = vpop.permute.xlu0 %823
        %825 = vset.pattern.permute.xlu0 0
        %826 = vperm.xlu0 %825, %v770
        %v827 = vpop.permute.xlu0 %826
        %828 = vset.pattern.permute.xlu0 0
        %829 = vperm.xlu0 %828, %v772
        %v830 = vpop.permute.xlu0 %829
        %831 = vset.pattern.permute.xlu0 0
        %832 = vperm.xlu0 %831, %v774
        %v833 = vpop.permute.xlu0 %832
        %834 = vset.pattern.permute.xlu0 0
        %835 = vperm.xlu0 %834, %v776
        %v836 = vpop.permute.xlu0 %835
        %837 = vset.pattern.permute.xlu0 0
        %838 = vperm.xlu0 %837, %v778
        %v839 = vpop.permute.xlu0 %838
        %840 = vset.pattern.permute.xlu0 0
        %841 = vperm.xlu0 %840, %v780
        %v842 = vpop.permute.xlu0 %841
        %843 = vset.pattern.permute.xlu0 0
        %844 = vperm.xlu0 %843, %v782
        %v845 = vpop.permute.xlu0 %844
        %846 = vset.pattern.permute.xlu0 0
        %847 = vperm.xlu0 %846, %v784
        %v848 = vpop.permute.xlu0 %847
        %v849 = vperm.slane %v803, %v674
        %v850 = vperm.slane %v806, %v676
        %v851 = vsel %vm678, %v850, %v849
        %v852 = vperm.slane %v809, %v674
        %v853 = vperm.slane %v812, %v676
        %v854 = vsel %vm678, %v853, %v852
        %v855 = vperm.slane %v815, %v674
        %v856 = vperm.slane %v818, %v676
        %v857 = vsel %vm678, %v856, %v855
        %v858 = vperm.slane %v821, %v674
        %v859 = vperm.slane %v824, %v676
        %v860 = vsel %vm678, %v859, %v858
        %v861 = vperm.slane %v827, %v674
        %v862 = vperm.slane %v830, %v676
        %v863 = vsel %vm678, %v862, %v861
        %v864 = vperm.slane %v833, %v674
        %v865 = vperm.slane %v836, %v676
        %v866 = vsel %vm678, %v865, %v864
        %v867 = vperm.slane %v839, %v674
        %v868 = vperm.slane %v842, %v676
        %v869 = vsel %vm678, %v868, %v867
        %v870 = vperm.slane %v845, %v674
        %v871 = vperm.slane %v848, %v676
        %v872 = vsel %vm678, %v871, %v870
        %v873 = vsel %vm701, %v854, %v851
        %v874 = vsel %vm703, %v857, %v873
        %v875 = vsel %vm705, %v860, %v874
        %v876 = vsel %vm707, %v863, %v875
        %v877 = vsel %vm709, %v866, %v876
        %v878 = vsel %vm711, %v869, %v877
        %v879 = vsel %vm713, %v872, %v878
        %v881 = vsel %vm716, %v879, 0.0
        %882 = vadd.xlane.f32.xlu0 %v881
        %v883 = vpop.xlane.xlu0 %882
        %v884 = vrcp.pop %v883
        %v885 = vmul.f32 %v883, %v884
        %v886 = vsub.f32 1.0, %v885
        %v887 = vmul.f32 %v884, %v886
        %v888 = vadd.f32 %v884, %v887
        %vm889 = vweird.f32 %v883
        %vm890 = vweird.f32 %v884
        %vm891 = vmor %vm889, %vm890
        %v892 = vsel %vm891, %v884, %v888
        %v893 = vand.u32 2147483647, %v883
        %vm894 = vcmp.eq.f32.partialorder %v893, 8.507059e+37
        %v895 = vand.u32 %v883, 2147483648
        %v896 = vor.u32 1.1754944e-38, %v895
        %v897 = vsel %vm894, %v896, %v892
        %v899 = vperm.slane %v897, 0
        %v900 = vperm.slane %v897, 1
        %v901 = vperm.slane %v897, 2
        %v902 = vperm.slane %v897, 3
        %v903 = vperm.slane %v897, 4
        %v904 = vperm.slane %v897, 5
        %v905 = vperm.slane %v897, 6
        %v906 = vperm.slane %v897, 7
        %v915 = vmul.f32 %v754, %v899
        %v916 = vmul.f32 %v756, %v899
        %v917 = vmul.f32 %v758, %v900
        %v918 = vmul.f32 %v760, %v900
        %v919 = vmul.f32 %v762, %v901
        %v920 = vmul.f32 %v764, %v901
        %v921 = vmul.f32 %v766, %v902
        %v922 = vmul.f32 %v768, %v902
        %v923 = vmul.f32 %v770, %v903
        %v924 = vmul.f32 %v772, %v903
        %v925 = vmul.f32 %v774, %v904
        %v926 = vmul.f32 %v776, %v904
        %v927 = vmul.f32 %v778, %v905
        %v928 = vmul.f32 %v780, %v905
        %v929 = vmul.f32 %v782, %v906
        %v930 = vmul.f32 %v784, %v906
        %932 = vset.pattern.permute.xlu0 0
        %933 = vperm.xlu0 %932, %v915
        %v934 = vpop.permute.xlu0 %933
        %937 = vset.pattern.permute.xlu0 0
        %938 = vperm.xlu0 %937, %v916
        %v939 = vpop.permute.xlu0 %938
        %942 = vset.pattern.permute.xlu0 0
        %943 = vperm.xlu0 %942, %v917
        %v944 = vpop.permute.xlu0 %943
        %947 = vset.pattern.permute.xlu0 0
        %948 = vperm.xlu0 %947, %v918
        %v949 = vpop.permute.xlu0 %948
        %952 = vset.pattern.permute.xlu0 0
        %953 = vperm.xlu0 %952, %v919
        %v954 = vpop.permute.xlu0 %953
        %957 = vset.pattern.permute.xlu0 0
        %958 = vperm.xlu0 %957, %v920
        %v959 = vpop.permute.xlu0 %958
        %962 = vset.pattern.permute.xlu0 0
        %963 = vperm.xlu0 %962, %v921
        %v964 = vpop.permute.xlu0 %963
        %967 = vset.pattern.permute.xlu0 0
        %968 = vperm.xlu0 %967, %v922
        %v969 = vpop.permute.xlu0 %968
        %972 = vset.pattern.permute.xlu0 0
        %973 = vperm.xlu0 %972, %v923
        %v974 = vpop.permute.xlu0 %973
        %977 = vset.pattern.permute.xlu0 0
        %978 = vperm.xlu0 %977, %v924
        %v979 = vpop.permute.xlu0 %978
        %982 = vset.pattern.permute.xlu0 0
        %983 = vperm.xlu0 %982, %v925
        %v984 = vpop.permute.xlu0 %983
        %987 = vset.pattern.permute.xlu0 0
        %988 = vperm.xlu0 %987, %v926
        %v989 = vpop.permute.xlu0 %988
        %992 = vset.pattern.permute.xlu0 0
        %993 = vperm.xlu0 %992, %v927
        %v994 = vpop.permute.xlu0 %993
        %997 = vset.pattern.permute.xlu0 0
        %998 = vperm.xlu0 %997, %v928
        %v999 = vpop.permute.xlu0 %998
        %1002 = vset.pattern.permute.xlu0 0
        %1003 = vperm.xlu0 %1002, %v929
        %v1004 = vpop.permute.xlu0 %1003
        %1007 = vset.pattern.permute.xlu0 0
        %1008 = vperm.xlu0 %1007, %v930
        %v1009 = vpop.permute.xlu0 %1008
        %v1011 = vmul.f32 %v934, %v371
        %v1012 = vmul.f32 %v939, %v372
        %v1013 = vmul.f32 %v944, %v373
        %v1014 = vmul.f32 %v949, %v374
        %v1015 = vmul.f32 %v954, %v375
        %v1016 = vmul.f32 %v959, %v376
        %v1017 = vmul.f32 %v964, %v377
        %v1018 = vmul.f32 %v969, %v378
        %v1019 = vmul.f32 %v974, %v379
        %v1020 = vmul.f32 %v979, %v380
        %v1021 = vmul.f32 %v984, %v381
        %v1022 = vmul.f32 %v989, %v382
        %v1023 = vmul.f32 %v994, %v383
        %v1024 = vmul.f32 %v999, %v384
        %v1025 = vmul.f32 %v1004, %v385
        %v1026 = vmul.f32 %v1009, %v386
        %v1027 = vsel %vm391, %v1011, 0.0
        %v1028 = vsel %vm391, %v1012, 0.0
        %v1029 = vadd.f32 %v1027, %v1028
        %v1030 = vrot.slane %v1029, 4
        %v1031 = vadd.f32 %v1029, %v1030
        %v1032 = vrot.slane %v1031, 2
        %v1033 = vadd.f32 %v1031, %v1032
        %v1034 = vrot.slane %v1033, 1
        %v1035 = vadd.f32 %v1033, %v1034
        %v1036 = vsel %vm391, %v1013, 0.0
        %v1037 = vsel %vm391, %v1014, 0.0
        %v1038 = vadd.f32 %v1036, %v1037
        %v1039 = vrot.slane %v1038, 4
        %v1040 = vadd.f32 %v1038, %v1039
        %v1041 = vrot.slane %v1040, 2
        %v1042 = vadd.f32 %v1040, %v1041
        %v1043 = vrot.slane %v1042, 1
        %v1044 = vadd.f32 %v1042, %v1043
        %v1045 = vsel %vm391, %v1015, 0.0
        %v1046 = vsel %vm391, %v1016, 0.0
        %v1047 = vadd.f32 %v1045, %v1046
        %v1048 = vrot.slane %v1047, 4
        %v1049 = vadd.f32 %v1047, %v1048
        %v1050 = vrot.slane %v1049, 2
        %v1051 = vadd.f32 %v1049, %v1050
        %v1052 = vrot.slane %v1051, 1
        %v1053 = vadd.f32 %v1051, %v1052
        %v1054 = vsel %vm391, %v1017, 0.0
        %v1055 = vsel %vm391, %v1018, 0.0
        %v1056 = vadd.f32 %v1054, %v1055
        %v1057 = vrot.slane %v1056, 4
        %v1058 = vadd.f32 %v1056, %v1057
        %v1059 = vrot.slane %v1058, 2
        %v1060 = vadd.f32 %v1058, %v1059
        %v1061 = vrot.slane %v1060, 1
        %v1062 = vadd.f32 %v1060, %v1061
        %v1063 = vsel %vm391, %v1019, 0.0
        %v1064 = vsel %vm391, %v1020, 0.0
        %v1065 = vadd.f32 %v1063, %v1064
        %v1066 = vrot.slane %v1065, 4
        %v1067 = vadd.f32 %v1065, %v1066
        %v1068 = vrot.slane %v1067, 2
        %v1069 = vadd.f32 %v1067, %v1068
        %v1070 = vrot.slane %v1069, 1
        %v1071 = vadd.f32 %v1069, %v1070
        %v1072 = vsel %vm391, %v1021, 0.0
        %v1073 = vsel %vm391, %v1022, 0.0
        %v1074 = vadd.f32 %v1072, %v1073
        %v1075 = vrot.slane %v1074, 4
        %v1076 = vadd.f32 %v1074, %v1075
        %v1077 = vrot.slane %v1076, 2
        %v1078 = vadd.f32 %v1076, %v1077
        %v1079 = vrot.slane %v1078, 1
        %v1080 = vadd.f32 %v1078, %v1079
        %v1081 = vsel %vm391, %v1023, 0.0
        %v1082 = vsel %vm391, %v1024, 0.0
        %v1083 = vadd.f32 %v1081, %v1082
        %v1084 = vrot.slane %v1083, 4
        %v1085 = vadd.f32 %v1083, %v1084
        %v1086 = vrot.slane %v1085, 2
        %v1087 = vadd.f32 %v1085, %v1086
        %v1088 = vrot.slane %v1087, 1
        %v1089 = vadd.f32 %v1087, %v1088
        %v1090 = vsel %vm391, %v1025, 0.0
        %v1091 = vsel %vm391, %v1026, 0.0
        %v1092 = vadd.f32 %v1090, %v1091
        %v1093 = vrot.slane %v1092, 4
        %v1094 = vadd.f32 %v1092, %v1093
        %v1095 = vrot.slane %v1094, 2
        %v1096 = vadd.f32 %v1094, %v1095
        %v1097 = vrot.slane %v1096, 1
        %v1098 = vadd.f32 %v1096, %v1097
        %v1107 = vsel %vm701, %v1044, %v1035
        %v1108 = vsel %vm703, %v1053, %v1107
        %v1109 = vsel %vm705, %v1062, %v1108
        %v1110 = vsel %vm707, %v1071, %v1109
        %v1111 = vsel %vm709, %v1080, %v1110
        %v1112 = vsel %vm711, %v1089, %v1111
        %v1113 = vsel %vm713, %v1098, %v1112
        %1115 = vst.msk [vmem:[%s357] sm:$0xff] %vm391, %v1113
        %v1116 = vperm.slane %v934, %v674
        %v1117 = vperm.slane %v939, %v676
        %v1118 = vsel %vm678, %v1117, %v1116
        %v1119 = vperm.slane %v944, %v674
        %v1120 = vperm.slane %v949, %v676
        %v1121 = vsel %vm678, %v1120, %v1119
        %v1122 = vperm.slane %v954, %v674
        %v1123 = vperm.slane %v959, %v676
        %v1124 = vsel %vm678, %v1123, %v1122
        %v1125 = vperm.slane %v964, %v674
        %v1126 = vperm.slane %v969, %v676
        %v1127 = vsel %vm678, %v1126, %v1125
        %v1128 = vperm.slane %v974, %v674
        %v1129 = vperm.slane %v979, %v676
        %v1130 = vsel %vm678, %v1129, %v1128
        %v1131 = vperm.slane %v984, %v674
        %v1132 = vperm.slane %v989, %v676
        %v1133 = vsel %vm678, %v1132, %v1131
        %v1134 = vperm.slane %v994, %v674
        %v1135 = vperm.slane %v999, %v676
        %v1136 = vsel %vm678, %v1135, %v1134
        %v1137 = vperm.slane %v1004, %v674
        %v1138 = vperm.slane %v1009, %v676
        %v1139 = vsel %vm678, %v1138, %v1137
        %v1140 = vsel %vm701, %v1121, %v1118
        %v1141 = vsel %vm703, %v1124, %v1140
        %v1142 = vsel %vm705, %v1127, %v1141
        %v1143 = vsel %vm707, %v1130, %v1142
        %v1144 = vsel %vm709, %v1133, %v1143
        %v1145 = vsel %vm711, %v1136, %v1144
        %v1146 = vsel %vm713, %v1139, %v1145
        %1148 = vst.msk [vmem:[%s364] sm:$0xff] %vm716, %v1146
        %s1149 = sand.u32 %s154, 1
        %s1150 = scalar_lea.sflag [#allocation4], %s1149
        %s1151 = sand.u32 %s154, 1
        %s1152 = smul.addr %s1151, 8
        %s1153 = scalar_lea.vmem [#allocation10], %s1152
        %s1154 = sand.u32 %s180, 1
        %s1155 = scalar_lea.sflag [#allocation12], %s1154
        %s1156 = sand.u32 %s180, 1
        %s1157 = smul.addr %s1156, 8
        %s1158 = scalar_lea.vmem [#allocation11], %s1157
        // Predicated region
        $region57: #{tpu_custom_call.1} parent=39 // pred_check
          %p1159 = pneg %p164
        $region58: #{tpu_custom_call.1} parent=39 // pred_check_branch
          %1161 = sbr.rel (%p1159) target = $region60
        $region59: #{tpu_custom_call.1} parent=39 // pred_region
          %1163 = vsyncadd %s1150, 0
          %s1164 = smul.addr %s31, 8
          %s1165 = scalar_lea.hbm %s5, %s1164
          %s1167 = sshll.u32 %s1153, 4
          %s1168 = int_to_ptr.vmem [resolvable:$true] %s1167
          %s1169 = sshll.u32 %s1165, 4
          %s1170 = int_to_ptr.hbm [resolvable:$true] %s1169
          %1172 = dma.vmem_to_hbm [thread:$0]  %s1168, 128, %s1170, %s1150
        $region60: #{tpu_custom_call.1} parent=39 // pred_fallthru
          _
        // Predicated region
        $region61: #{tpu_custom_call.1} parent=39 // pred_check
          %p1173 = pneg %p190
        $region62: #{tpu_custom_call.1} parent=39 // pred_check_branch
          %1175 = sbr.rel (%p1173) target = $region64
        $region63: #{tpu_custom_call.1} parent=39 // pred_region
          %1177 = vsyncadd %s1155, 0
          %s1178 = smul.addr %s31, 8
          %s1179 = scalar_lea.hbm %s6, %s1178
          %s1181 = sshll.u32 %s1158, 4
          %s1182 = int_to_ptr.vmem [resolvable:$true] %s1181
          %s1183 = sshll.u32 %s1179, 4
          %s1184 = int_to_ptr.hbm [resolvable:$true] %s1183
          %1186 = dma.vmem_to_hbm [thread:$0]  %s1182, 128, %s1184, %s1155
        $region64: #{tpu_custom_call.1} parent=39 // pred_fallthru
          _
      $region40: #{tpu_custom_call.1} parent=5 // pred_fallthru
        _
      %p1187 = scmp.le.s32.totalorder 2, %s26
      // Predicated region
      $region65: #{tpu_custom_call.1} parent=5 // pred_check
        %p1188 = pneg %p1187
      $region66: #{tpu_custom_call.1} parent=5 // pred_check_branch
        %1190 = sbr.rel (%p1188) target = $region68
      $region67: #{tpu_custom_call.1} parent=5 // pred_region
        %s1191 = ssub.s32 %s26, 2
        // Predicated region
        $region69: #{tpu_custom_call.1} parent=67 // pred_check
          %p1192 = pneg %p170
        $region70: #{tpu_custom_call.1} parent=67 // pred_check_branch
          %1194 = sbr.rel (%p1192) target = $region72
        $region71: #{tpu_custom_call.1} parent=67 // pred_region
          %s1195 = sand.u32 %s155, 1
          %s1196 = scalar_lea.sflag [#allocation4], %s1195
          %s1197 = sand.u32 %s155, 1
          %s1198 = smul.addr %s1197, 8
          %s1199 = scalar_lea.vmem [#allocation10], %s1198
          %1201 = dma.done %s1196, 128
        $region72: #{tpu_custom_call.1} parent=67 // pred_fallthru
          _
        // Predicated region
        $region73: #{tpu_custom_call.1} parent=67 // pred_check
          %p1202 = pneg %p196
        $region74: #{tpu_custom_call.1} parent=67 // pred_check_branch
          %1204 = sbr.rel (%p1202) target = $region76
        $region75: #{tpu_custom_call.1} parent=67 // pred_region
          %s1205 = sand.u32 %s181, 1
          %s1206 = scalar_lea.sflag [#allocation12], %s1205
          %s1207 = sand.u32 %s181, 1
          %s1208 = smul.addr %s1207, 8
          %s1209 = scalar_lea.vmem [#allocation11], %s1208
          %1211 = dma.done %s1206, 128
        $region76: #{tpu_custom_call.1} parent=67 // pred_fallthru
          _
      $region68: #{tpu_custom_call.1} parent=5 // pred_fallthru
        _
    $region6: #{tpu_custom_call.1} parent=1 // loop_footer
      %s30 = sadd.s32 1, %s26
    $region7: #{tpu_custom_call.1} parent=1 // loop_footer_branch
      %25 = sbr.rel target = $region3
    $region8: #{tpu_custom_call.1} parent=1 // loop_exit
      _
    %1212 = vsyncpa [#allocation3], 1
    %s1213 = scalar_lea.sflag [#allocation3], 1
    %1214 = vsyncpa %s1213, 1
    %1215 = vsyncpa [#allocation6], 1
    %s1216 = scalar_lea.sflag [#allocation6], 1
    %1217 = vsyncpa %s1216, 1
    %1218 = vsyncpa [#allocation9], 1
    %1219 = vsyncpa [#allocation4], 1
    %s1220 = scalar_lea.sflag [#allocation4], 1
    %1221 = vsyncpa %s1220, 1
    %1222 = vsyncpa [#allocation12], 1
    %s1223 = scalar_lea.sflag [#allocation12], 1
    %1224 = vsyncpa %s1223, 1

</llo_original>
